<compile_context>
chip_gen: v7x
topology: tpu7x:2x2x1
jax: 0.10.0
libtpu: 0.0.40
codegen_flags: <defaults>
</compile_context>

<pallas_src>
import functools

import jax
import jax.numpy as jnp
from jax import lax
from jax.experimental import pallas as pl
from jax.experimental.pallas import tpu as pltpu

LN_EPS = 1e-5


def _round_up(x, m):
    return ((x + m - 1) // m) * m


@functools.lru_cache(maxsize=1)
def _vmem_limit_bytes():
    """~75% of physical VMEM: ~96 MiB on v5e/v6e (128 MiB), ~48 MiB on v7x (64 MiB)."""
    cap = 128 * 1024 * 1024
    try:
        info = pltpu.get_tpu_info()
        cap = int(getattr(info, "vmem_capacity_bytes", cap) or cap)
    except Exception:
        pass
    return (cap * 3) // 4


def _pick_tn(d_out, tile_cols):
    """Column tile: multiple of 128 dividing d_out, <= tile_cols, and giving
    >=2 column tiles when d_out allows it (amortizes the j==0 LN work)."""
    if d_out <= 128 or d_out % 128 != 0:
        return d_out
    cap = min(tile_cols, d_out // 2)
    tn = (cap // 128) * 128
    while tn >= 128 and d_out % tn != 0:
        tn -= 128
    return tn if tn >= 128 else d_out


def _fit_row_tile(tm, d, tn, x_bytes, budget):
    """Shrink the row tile until the per-step VMEM footprint fits the budget."""
    def footprint(tm_):
        return (2 * tm_ * d * x_bytes          # x tile, double-buffered
                + 2 * d * tn * 2               # bf16 weight tile, double-buffered
                + tm_ * d * 2                  # bf16 normalized-rows scratch
                + 2 * tm_ * tn * x_bytes       # output tile, double-buffered
                + 4 * d * 4 + 2 * tn * 4)      # gamma/beta/bias (small)
    while tm > 8 and footprint(tm) > budget:
        tm = max(8, tm // 2)
    return tm


def _pick_tm(n, tile_rows):
    """Row tile: big to amortize weight re-streaming, but always >=2 row tiles
    for small N (feeds both v7x TensorCores, bounds ragged-edge waste)."""
    return max(8, min(tile_rows, _round_up(max(-(-n // 2), 1), 8)))


# ----------------------- Fused LayerNorm + Linear kernel ---------------------
def _fused_prenorm_linear_kernel(x_ref, g_ref, b_ref, w_ref, bias_ref, o_ref, xn_ref):
    j = pl.program_id(1)

    # LayerNorm is computed once per row tile (first d_out tile) in f32, stored
    # as bf16 in VMEM scratch, and reused for every j.
    # INVARIANT: this relies on axis 1 (d_out) being the innermost sequential
    # ("arbitrary") grid axis and on the x block index being independent of j.
    # Do not mark axis 1 "parallel" or reorder the grid.
    @pl.when(j == 0)
    def _():
        x = x_ref[...].astype(jnp.float32)                  # (tm, D)
        inv_d = 1.0 / x.shape[-1]
        s = jnp.sum(x, axis=-1, keepdims=True)
        sq = jnp.sum(x * x, axis=-1, keepdims=True)
        mean = s * inv_d
        var = jnp.maximum(sq * inv_d - mean * mean, 0.0)    # biased var (torch LN)
        inv = lax.rsqrt(var + LN_EPS)
        g = g_ref[...].astype(jnp.float32)                  # (1, D)
        b = b_ref[...].astype(jnp.float32)                  # (1, D)
        xn_ref[...] = ((x - mean) * inv * g + b).astype(xn_ref.dtype)

    # bf16 x bf16 -> f32 accumulate on the MXU.
    acc = jnp.dot(xn_ref[...], w_ref[...], preferred_element_type=jnp.float32)
    o_ref[...] = (acc + bias_ref[...].astype(jnp.float32)).astype(o_ref.dtype)


def fused_prenorm_linear(x2d, gamma, beta, w, bias, *,
                         tile_rows=512, tile_cols=512):
    """y = LayerNorm(x2d) @ w + bias in one pallas_call.

    x2d: (N, D); gamma/beta: (D,); w: (D, D_out); bias: (D_out,)."""
    n, d = x2d.shape
    d_in, d_out = w.shape
    assert d_in == d

    # One-time HBM cast of the weight to bf16 (halves weight DMA, bf16 MXU).
    w_mxu = w if w.dtype == jnp.bfloat16 else w.astype(jnp.bfloat16)

    tn = _pick_tn(d_out, tile_cols)
    assert d_out % tn == 0
    vmem_limit = _vmem_limit_bytes()
    tm = _fit_row_tile(_pick_tm(n, tile_rows), d, tn, x2d.dtype.itemsize, vmem_limit)

    grid = (pl.cdiv(n, tm), d_out // tn)   # ragged last row tile handled by Pallas

    return pl.pallas_call(
        _fused_prenorm_linear_kernel,
        out_shape=jax.ShapeDtypeStruct((n, d_out), x2d.dtype),
        grid_spec=pltpu.PrefetchScalarGridSpec(
            num_scalar_prefetch=0,
            grid=grid,
            in_specs=[
                pl.BlockSpec((tm, d), lambda i, j: (i, 0)),    # x rows (reused over j)
                pl.BlockSpec((1, d), lambda i, j: (0, 0)),     # gamma
                pl.BlockSpec((1, d), lambda i, j: (0, 0)),     # beta
                pl.BlockSpec((d, tn), lambda i, j: (0, j)),    # bf16 weight column tile
                pl.BlockSpec((1, tn), lambda i, j: (0, j)),    # bias column tile
            ],
            out_specs=pl.BlockSpec((tm, tn), lambda i, j: (i, j)),
            scratch_shapes=[pltpu.VMEM((tm, d), jnp.bfloat16)],  # normalized rows
        ),
        compiler_params=pltpu.CompilerParams(
            dimension_semantics=("parallel", "arbitrary"),
            vmem_limit_bytes=vmem_limit),
    )(x2d, gamma.reshape(1, d), beta.reshape(1, d), w_mxu, bias.reshape(1, d_out))


# --------------------- Standalone LayerNorm kernel (generic) -----------------
def _layernorm_kernel(x_ref, g_ref, b_ref, o_ref):
    x = x_ref[...].astype(jnp.float32)                      # (tm, D)
    inv_d = 1.0 / x.shape[-1]
    s = jnp.sum(x, axis=-1, keepdims=True)
    sq = jnp.sum(x * x, axis=-1, keepdims=True)
    mean = s * inv_d
    var = jnp.maximum(sq * inv_d - mean * mean, 0.0)
    inv = lax.rsqrt(var + LN_EPS)
    y = (x - mean) * inv * g_ref[...].astype(jnp.float32) + b_ref[...].astype(jnp.float32)
    o_ref[...] = y.astype(o_ref.dtype)


def layernorm_pallas(x2d, gamma, beta, *, tile_rows=512):
    """x2d: (N, D); gamma/beta: (D,). Normalizes over last dim."""
    n, d = x2d.shape
    tm = _pick_tm(n, tile_rows)
    vmem_limit = _vmem_limit_bytes()
    # For best v5e store throughput D should be a multiple of 128 (unmasked vst);
    # non-multiples are still correct (masked stores).
    return pl.pallas_call(
        _layernorm_kernel,
        out_shape=jax.ShapeDtypeStruct((n, d), x2d.dtype),
        grid_spec=pltpu.PrefetchScalarGridSpec(
            num_scalar_prefetch=0,
            grid=(pl.cdiv(n, tm),),
            in_specs=[
                pl.BlockSpec((tm, d), lambda i: (i, 0)),
                pl.BlockSpec((1, d), lambda i: (0, 0)),
                pl.BlockSpec((1, d), lambda i: (0, 0)),
            ],
            out_specs=pl.BlockSpec((tm, d), lambda i: (i, 0)),
        ),
        compiler_params=pltpu.CompilerParams(
            dimension_semantics=("parallel",),
            vmem_limit_bytes=vmem_limit),
    )(x2d, gamma.reshape(1, d), beta.reshape(1, d))


# ---------------------------------- PreNorm ----------------------------------
class PreNorm:
    """Generic port of PreNorm: y = module(LayerNorm(x)).

    The wrapped `module` is an arbitrary callable, so it cannot be fused in
    general; the LayerNorm itself runs as a Pallas kernel."""

    def __init__(self, dim, module, gamma, beta):
        self.dim = dim
        self.module = module
        self.gamma = gamma            # (dim,)  — nn.LayerNorm weight
        self.beta = beta              # (dim,)  — nn.LayerNorm bias

    def __call__(self, x, **kwargs):
        b, s, d = x.shape
        assert d == self.dim
        xn = layernorm_pallas(x.reshape(b * s, d), self.gamma, self.beta)
        return self.module(xn.reshape(b, s, d), **kwargs)


class PreNormLinear:
    """PreNorm specialized to a Linear wrapped module: LN + matmul fused in one
    pallas_call (no HBM round trip for the normalized activations)."""

    def __init__(self, dim, gamma, beta, w, bias):
        self.dim = dim
        self.gamma = gamma
        self.beta = beta
        self.w = w                    # (dim, dim_out)
        self.bias = bias              # (dim_out,)

    def __call__(self, x):
        b, s, d = x.shape
        assert d == self.dim
        y = fused_prenorm_linear(x.reshape(b * s, d), self.gamma, self.beta,
                                 self.w, self.bias)
        return y.reshape(b, s, -1)


# --------------------------------- Reference ---------------------------------
def layernorm_ref(x, gamma, beta):
    mean = jnp.mean(x, axis=-1, keepdims=True)
    var = jnp.mean((x - mean) ** 2, axis=-1, keepdims=True)
    return (x - mean) / jnp.sqrt(var + LN_EPS) * gamma + beta


if __name__ == "__main__":
    key = jax.random.PRNGKey(0)
    kx, kg, kb, kw, kbias, kx2 = jax.random.split(key, 6)

    # D multiple of 128 -> lane-dense vector ops and unmasked stores.
    B, S, D = 2, 8, 256
    x = jax.random.normal(kx, (B, S, D), dtype=jnp.float32)

    # LayerNorm params (nn.LayerNorm(dim): weight (D,), bias (D,)).
    gamma = 1.0 + 0.05 * jax.random.normal(kg, (D,), dtype=jnp.float32)
    beta = 0.05 * jax.random.normal(kb, (D,), dtype=jnp.float32)

    # Representative wrapped module: Linear(D, D).
    # TODO(synk): the wrapped `module` in the original code is an arbitrary
    # Callable; only the Linear case is fused, the generic path uses the
    # standalone LayerNorm kernel followed by the callable.
    w = jax.random.normal(kw, (D, D), dtype=jnp.float32) / (D ** 0.5)
    lin_bias = 0.05 * jax.random.normal(kbias, (D,), dtype=jnp.float32)

    # Fused path (single pallas_call, bf16 MXU feed).
    fused = PreNormLinear(D, gamma, beta, w, lin_bias)
    out_fused = jax.block_until_ready(fused(x))

    # Generic path (LN kernel + arbitrary callable module, all f32).
    prenorm = PreNorm(D, lambda xn: xn @ w + lin_bias, gamma, beta)
    out_generic = jax.block_until_ready(prenorm(x))

    # References: full-f32, and a bf16-rounded reference matching the fused
    # kernel's precision (LN in f32 -> bf16, bf16 weight, f32 accumulate).
    ref_ln = layernorm_ref(x, gamma, beta)
    ref_f32 = ref_ln @ w + lin_bias
    ref_bf16 = (ref_ln.astype(jnp.bfloat16).astype(jnp.float32)
                @ w.astype(jnp.bfloat16).astype(jnp.float32)) + lin_bias

    assert out_fused.shape == (B, S, D)
    assert jnp.allclose(out_fused, ref_bf16, atol=1e-2, rtol=1e-2), "fused mismatch (bf16 ref)"
    assert jnp.allclose(out_fused, ref_f32, atol=5e-2, rtol=5e-2), "fused mismatch (f32 ref)"
    assert jnp.allclose(out_generic, ref_f32, atol=5e-3, rtol=5e-3), "generic mismatch"

    # Ragged-rows check (N=10 rows, tm=8 -> last row tile is partial; no
    # wrapper pad/slice anymore, Pallas clips the edge block).
    S2 = 5
    x2 = jax.random.normal(kx2, (B, S2, D), dtype=jnp.float32)
    out_fused2 = jax.block_until_ready(fused(x2))
    ref_ln2 = layernorm_ref(x2, gamma, beta)
    ref2_bf16 = (ref_ln2.astype(jnp.bfloat16).astype(jnp.float32)
                 @ w.astype(jnp.bfloat16).astype(jnp.float32)) + lin_bias
    assert out_fused2.shape == (B, S2, D)
    assert jnp.allclose(out_fused2, ref2_bf16, atol=1e-2, rtol=1e-2), "ragged fused mismatch"

    xn2 = jax.block_until_ready(
        layernorm_pallas(x2.reshape(B * S2, D), gamma, beta)).reshape(B, S2, D)
    assert jnp.allclose(xn2, ref_ln2, atol=2e-3, rtol=2e-3), "ragged LN mismatch"

    print("KERNEL_OK")
</pallas_src>

<mosaic_0001>
module attributes {stable_mosaic.version = 11 : i64} {
  func.func @_fused_prenorm_linear_kernel(%arg0: i32, %arg1: i32, %arg2: memref<8x256xf32, #tpu.memory_space<vmem>>, %arg3: memref<1x256xf32, #tpu.memory_space<vmem>>, %arg4: memref<1x256xf32, #tpu.memory_space<vmem>>, %arg5: memref<256x128xbf16, #tpu.memory_space<vmem>>, %arg6: memref<1x128xf32, #tpu.memory_space<vmem>>, %arg7: memref<8x128xf32, #tpu.memory_space<vmem>>, %arg8: memref<8x256xbf16, #tpu.memory_space<vmem>>) attributes {dimension_semantics = [#tpu.dimension_semantics<parallel>, #tpu.dimension_semantics<arbitrary>], iteration_bounds = array<i64: 2, 2>, scalar_prefetch = 0 : i64, scratch_operands = 1 : i64, tpu.core_type = #tpu.core_type<tc>, window_params = [{transform_indices = @transform_0, window_bounds = array<i64: 8, 256>}, {pipeline_mode = #tpu.pipeline_mode<synchronous>, transform_indices = @transform_1, window_bounds = array<i64: 1, 256>}, {pipeline_mode = #tpu.pipeline_mode<synchronous>, transform_indices = @transform_2, window_bounds = array<i64: 1, 256>}, {transform_indices = @transform_3, window_bounds = array<i64: 256, 128>}, {transform_indices = @transform_4, window_bounds = array<i64: 1, 128>}, {transform_indices = @transform_5, window_bounds = array<i64: 8, 128>}]} {
    %c0_i32 = arith.constant 0 : i32
    %0 = arith.cmpi eq, %arg1, %c0_i32 : i32
    %1 = arith.extui %0 : i1 to i32
    %c0_i32_0 = arith.constant 0 : i32
    %2 = arith.cmpi ne, %1, %c0_i32_0 : i32
    scf.if %2 {
      %c0_8 = arith.constant 0 : index
      %c0_9 = arith.constant 0 : index
      %10 = vector.load %arg2[%c0_8, %c0_9] : memref<8x256xf32, #tpu.memory_space<vmem>>, vector<8x256xf32>
      %cst_10 = arith.constant dense<0.000000e+00> : vector<8xf32>
      %11 = vector.multi_reduction <add>, %10, %cst_10 [1] : vector<8x256xf32> to vector<8xf32>
      %12 = vector.shape_cast %11 : vector<8xf32> to vector<8x1xf32>
      %13 = arith.mulf %10, %10 : vector<8x256xf32>
      %cst_11 = arith.constant dense<0.000000e+00> : vector<8xf32>
      %14 = vector.multi_reduction <add>, %13, %cst_11 [1] : vector<8x256xf32> to vector<8xf32>
      %15 = vector.shape_cast %14 : vector<8xf32> to vector<8x1xf32>
      %cst_12 = arith.constant 3.906250e-03 : f32
      %16 = vector.broadcast %cst_12 : f32 to vector<8x1xf32>
      %17 = arith.mulf %12, %16 : vector<8x1xf32>
      %cst_13 = arith.constant 3.906250e-03 : f32
      %18 = vector.broadcast %cst_13 : f32 to vector<8x1xf32>
      %19 = arith.mulf %15, %18 : vector<8x1xf32>
      %20 = arith.mulf %17, %17 : vector<8x1xf32>
      %21 = arith.subf %19, %20 : vector<8x1xf32>
      %cst_14 = arith.constant 0.000000e+00 : f32
      %22 = vector.broadcast %cst_14 : f32 to vector<8x1xf32>
      %23 = arith.maximumf %21, %22 : vector<8x1xf32>
      %cst_15 = arith.constant 9.99999974E-6 : f32
      %24 = vector.broadcast %cst_15 : f32 to vector<8x1xf32>
      %25 = arith.addf %23, %24 : vector<8x1xf32>
      %26 = math.rsqrt %25 : vector<8x1xf32>
      %c0_16 = arith.constant 0 : index
      %c0_17 = arith.constant 0 : index
      %27 = vector.load %arg3[%c0_16, %c0_17] : memref<1x256xf32, #tpu.memory_space<vmem>>, vector<1x256xf32>
      %c0_18 = arith.constant 0 : index
      %c0_19 = arith.constant 0 : index
      %28 = vector.load %arg4[%c0_18, %c0_19] : memref<1x256xf32, #tpu.memory_space<vmem>>, vector<1x256xf32>
      %29 = vector.broadcast %17 : vector<8x1xf32> to vector<8x256xf32>
      %30 = arith.subf %10, %29 : vector<8x256xf32>
      %31 = vector.broadcast %26 : vector<8x1xf32> to vector<8x256xf32>
      %32 = arith.mulf %30, %31 : vector<8x256xf32>
      %33 = vector.broadcast %27 : vector<1x256xf32> to vector<8x256xf32>
      %34 = arith.mulf %32, %33 : vector<8x256xf32>
      %35 = vector.broadcast %28 : vector<1x256xf32> to vector<8x256xf32>
      %36 = arith.addf %34, %35 : vector<8x256xf32>
      %37 = arith.truncf %36 : vector<8x256xf32> to vector<8x256xbf16>
      %c0_20 = arith.constant 0 : index
      %c0_21 = arith.constant 0 : index
      %38 = vector.load %arg8[%c0_20, %c0_21] : memref<8x256xbf16, #tpu.memory_space<vmem>>, vector<8x256xbf16>
      tpu.vector_store %arg8[%c0_20, %c0_21], %37 {strides = array<i32>} : memref<8x256xbf16, #tpu.memory_space<vmem>>, vector<8x256xbf16>,
    } else {
    }
    %c0 = arith.constant 0 : index
    %c0_1 = arith.constant 0 : index
    %3 = vector.load %arg8[%c0, %c0_1] : memref<8x256xbf16, #tpu.memory_space<vmem>>, vector<8x256xbf16>
    %c0_2 = arith.constant 0 : index
    %c0_3 = arith.constant 0 : index
    %4 = vector.load %arg5[%c0_2, %c0_3] : memref<256x128xbf16, #tpu.memory_space<vmem>>, vector<256x128xbf16>
    %cst = arith.constant dense<0.000000e+00> : vector<8x128xf32>
    %5 = tpu.matmul %3, %4, %cst {dimension_numbers = #tpu.dot_dimension_numbers<[1], [0], [0], [1], [0, 0, 1, 1], [], []>} : vector<8x256xbf16>, vector<256x128xbf16>, vector<8x128xf32> -> vector<8x128xf32>
    %c0_4 = arith.constant 0 : index
    %c0_5 = arith.constant 0 : index
    %6 = vector.load %arg6[%c0_4, %c0_5] : memref<1x128xf32, #tpu.memory_space<vmem>>, vector<1x128xf32>
    %7 = vector.broadcast %6 : vector<1x128xf32> to vector<8x128xf32>
    %8 = arith.addf %5, %7 : vector<8x128xf32>
    %c0_6 = arith.constant 0 : index
    %c0_7 = arith.constant 0 : index
    %9 = vector.load %arg7[%c0_6, %c0_7] : memref<8x128xf32, #tpu.memory_space<vmem>>, vector<8x128xf32>
    tpu.vector_store %arg7[%c0_6, %c0_7], %8 {strides = array<i32>} : memref<8x128xf32, #tpu.memory_space<vmem>>, vector<8x128xf32>,
    return
  }
  func.func @transform_0(%arg0: i32, %arg1: i32) -> (i32, i32) {
    %c0_i32 = arith.constant 0 : i32
    %c0_i32_0 = arith.constant 0 : i32
    return %arg0, %c0_i32 : i32, i32
  }
  func.func @transform_1(%arg0: i32, %arg1: i32) -> (i32, i32) {
    %c0_i32 = arith.constant 0 : i32
    %c0_i32_0 = arith.constant 0 : i32
    %c0_i32_1 = arith.constant 0 : i32
    return %c0_i32, %c0_i32_0 : i32, i32
  }
  func.func @transform_2(%arg0: i32, %arg1: i32) -> (i32, i32) {
    %c0_i32 = arith.constant 0 : i32
    %c0_i32_0 = arith.constant 0 : i32
    %c0_i32_1 = arith.constant 0 : i32
    return %c0_i32, %c0_i32_0 : i32, i32
  }
  func.func @transform_3(%arg0: i32, %arg1: i32) -> (i32, i32) {
    %c0_i32 = arith.constant 0 : i32
    %c0_i32_0 = arith.constant 0 : i32
    return %c0_i32, %arg1 : i32, i32
  }
  func.func @transform_4(%arg0: i32, %arg1: i32) -> (i32, i32) {
    %c0_i32 = arith.constant 0 : i32
    %c0_i32_0 = arith.constant 0 : i32
    return %c0_i32, %arg1 : i32, i32
  }
  func.func @transform_5(%arg0: i32, %arg1: i32) -> (i32, i32) {
    %c0_i32 = arith.constant 0 : i32
    return %arg0, %arg1 : i32, i32
  }
}

</mosaic_0001>

<llo_original>
// kernel: tpu_custom_call.1
$region0: #{tpu_custom_call.1}
  #allocation0 [shape = 'u32[]', space=smem, size = 0x4, offset = 0x4, fixed_abs, tag = 'smem constant byte address 0x4 - core index']
  #allocation1 [shape = 'u32[144,128]{1,0:T(1,128)}', space=vmem, size = 0x12000, scoped, tag = 'internal scratch']
  #allocation2 [shape = 'bf16[8,256]{1,0:T(8,128)(2,1)}', space=vmem, size = 0x1000, scoped, tag = 'scratch operand']
  %s0 = inlined_call_operand.hbm [shape: f32[16,256], index: 0, kind: input, shape index: {}]
  %s1 = inlined_call_operand.hbm [shape: f32[1,256], index: 1, kind: input, shape index: {}]
  %s2 = inlined_call_operand.hbm [shape: f32[1,256], index: 2, kind: input, shape index: {}]
  %s3 = inlined_call_operand.hbm [shape: bf16[256,256], index: 3, kind: input, shape index: {}]
  %s4 = inlined_call_operand.hbm [shape: f32[1,256], index: 4, kind: input, shape index: {}]
  %s5 = inlined_call_operand.hbm [shape: f32[16,256], index: 5, kind: output, shape index: {}]
  %s6 = sld [smem:[#allocation0]]
  $region77: #{tpu_custom_call.1} parent=0
    _
  %s8 = ssub.s32 1, %s6
  %s9 = scalar_select 0, %s8, %s6
  $region1: #{tpu_custom_call.1} parent=0
    #allocation3 [shape = 'u8[16384]{0}', space=vmem, size = 0x4000, scoped, tag = 'input window, operand 0']
    #allocation4 [shape = 's32[2]{0}', space=sflag, size = 0x8, scoped, tag = 'scoped memory for tpu_custom_call.1']
    #allocation5 [shape = 's32[2]{0}', space=sflag, size = 0x8, scoped, tag = 'scoped memory for tpu_custom_call.1']
    #allocation6 [shape = 'u8[1024]{0}', space=vmem, size = 0x400, scoped, tag = 'input window, operand 1, single buffered']
    #allocation7 [shape = 's32[1]{0}', space=sflag, size = 0x4, scoped, tag = 'scoped memory for tpu_custom_call.1']
    #allocation8 [shape = 'u8[1024]{0}', space=vmem, size = 0x400, scoped, tag = 'input window, operand 2, single buffered']
    #allocation9 [shape = 'u8[131072]{0}', space=vmem, size = 0x20000, scoped, tag = 'input window, operand 3']
    #allocation10 [shape = 's32[2]{0}', space=sflag, size = 0x8, scoped, tag = 'scoped memory for tpu_custom_call.1']
    #allocation11 [shape = 'u8[1024]{0}', space=vmem, size = 0x400, scoped, tag = 'input window, operand 4']
    #allocation12 [shape = 'u8[8192]{0}', space=vmem, size = 0x2000, scoped, tag = 'output window, operand 0']
    %10 = vsyncpa [#allocation4], 0
    %s11 = scalar_lea.sflag [#allocation4], 1
    %12 = vsyncpa %s11, 0
    %13 = vsyncpa [#allocation7], 0
    %14 = vsyncpa [#allocation10], 0
    %s15 = scalar_lea.sflag [#allocation10], 1
    %16 = vsyncpa %s15, 0
    %17 = vsyncpa [#allocation5], 0
    %s18 = scalar_lea.sflag [#allocation5], 1
    %19 = vsyncpa %s18, 0
    loop: start=0, step=1, limit=6
    $region2: #{tpu_custom_call.1} parent=1 // loop_pre_header
      _
    $region3: #{tpu_custom_call.1} parent=1 // loop_header
      %s21 = sphi 0, %s25
      %p22 = scmp.ge.s32.totalorder %s21, 6
      %s28 = sphi 0, %s40
      %s29 = sphi 0, %s36
      %s30 = sphi 0, %s28
      %s31 = sphi 0, %s29
      %s32 = sphi 0, %s30
      %s33 = sphi 0, %s31
      %s43 = sphi 0, %s45
      %s46 = sphi 0, %s43
      %s47 = sphi 0, %s46
      %s63 = sphi 0, %s47
      %s67 = sphi 0, %s67
      %s69 = sphi 0, %s67
      %s70 = sphi 0, %s69
      %s84 = sphi 0, %s70
      %s88 = sphi 0, %s88
      %s90 = sphi 0, %s88
      %s91 = sphi 0, %s90
      %s105 = sphi 0, %s91
      %s111 = sphi 0, %s113
      %s114 = sphi 0, %s111
      %s115 = sphi 0, %s114
      %s131 = sphi 0, %s115
      %s137 = sphi 0, %s139
      %s140 = sphi 0, %s137
      %s141 = sphi 0, %s140
      %s157 = sphi 0, %s141
      %s165 = sphi 0, %s167
      %s168 = sphi 0, %s165
      %s169 = sphi 0, %s168
      %s185 = sphi 0, %s169
    $region4: #{tpu_custom_call.1} parent=1 // loop_header_branch
      %24 = sbr.rel (%p22) target = $region8
    $region5: #{tpu_custom_call.1} parent=1 // loop_body
      %s26 = ssub.s32 %s21, 1
      %s27 = ssub.s32 %s21, 2
      %s34 = sadd.s32 1, %s29
      %p35 = scmp.ge.s32.totalorder %s34, 2
      %s36 = scalar_select %p35, 0, %s34
      %s37 = sadd.s32 1, %s28
      %s38 = scalar_select %p35, %s37, %s28
      %p39 = scmp.ge.s32.totalorder %s38, 2
      %s40 = scalar_select %p39, 0, %s38
      %s41 = ssub.s32 %s28, %s40
      %p42 = scmp.eq.s32.totalorder %s41, 0
      %s44 = sadd.s32 %s43, 1
      %s45 = scalar_select %p42, %s43, %s44
      %p48 = pneg %p42
      %p49 = scmp.eq.s32.totalorder %s21, 3
      %p50 = por %p48, %p49
      %p51 = scmp.ne.s32.totalorder %s43, %s46
      %p52 = scmp.eq.s32.totalorder %s21, 0
      %p53 = por %p51, %p52
      %p54 = scmp.ne.s32.totalorder %s43, %s46
      %p55 = scmp.eq.s32.totalorder %s26, 3
      %p56 = por %p54, %p55
      %p57 = scmp.ne.s32.totalorder %s46, %s47
      %p58 = scmp.eq.s32.totalorder %s26, 0
      %p59 = por %p57, %p58
      %p60 = scmp.ne.s32.totalorder %s46, %s47
      %p61 = scmp.eq.s32.totalorder %s27, 3
      %p62 = por %p60, %p61
      %p64 = scmp.ne.s32.totalorder %s47, %s63
      %p65 = scmp.eq.s32.totalorder %s27, 0
      %p66 = por %p64, %p65
      %s68 = sadd.s32 %s67, 1
      %p71 = scmp.eq.s32.totalorder %s21, 3
      %p72 = scmp.ne.s32.totalorder %s67, %s69
      %p73 = scmp.eq.s32.totalorder %s21, 0
      %p74 = por %p72, %p73
      %p75 = scmp.ne.s32.totalorder %s67, %s69
      %p76 = scmp.eq.s32.totalorder %s26, 3
      %p77 = por %p75, %p76
      %p78 = scmp.ne.s32.totalorder %s69, %s70
      %p79 = scmp.eq.s32.totalorder %s26, 0
      %p80 = por %p78, %p79
      %p81 = scmp.ne.s32.totalorder %s69, %s70
      %p82 = scmp.eq.s32.totalorder %s27, 3
      %p83 = por %p81, %p82
      %p85 = scmp.ne.s32.totalorder %s70, %s84
      %p86 = scmp.eq.s32.totalorder %s27, 0
      %p87 = por %p85, %p86
      %s89 = sadd.s32 %s88, 1
      %p92 = scmp.eq.s32.totalorder %s21, 3
      %p93 = scmp.ne.s32.totalorder %s88, %s90
      %p94 = scmp.eq.s32.totalorder %s21, 0
      %p95 = por %p93, %p94
      %p96 = scmp.ne.s32.totalorder %s88, %s90
      %p97 = scmp.eq.s32.totalorder %s26, 3
      %p98 = por %p96, %p97
      %p99 = scmp.ne.s32.totalorder %s90, %s91
      %p100 = scmp.eq.s32.totalorder %s26, 0
      %p101 = por %p99, %p100
      %p102 = scmp.ne.s32.totalorder %s90, %s91
      %p103 = scmp.eq.s32.totalorder %s27, 3
      %p104 = por %p102, %p103
      %p106 = scmp.ne.s32.totalorder %s91, %s105
      %p107 = scmp.eq.s32.totalorder %s27, 0
      %p108 = por %p106, %p107
      %s109 = ssub.s32 %s29, %s36
      %p110 = scmp.eq.s32.totalorder %s109, 0
      %s112 = sadd.s32 %s111, 1
      %s113 = scalar_select %p110, %s111, %s112
      %p116 = pneg %p110
      %p117 = scmp.eq.s32.totalorder %s21, 3
      %p118 = por %p116, %p117
      %p119 = scmp.ne.s32.totalorder %s111, %s114
      %p120 = scmp.eq.s32.totalorder %s21, 0
      %p121 = por %p119, %p120
      %p122 = scmp.ne.s32.totalorder %s111, %s114
      %p123 = scmp.eq.s32.totalorder %s26, 3
      %p124 = por %p122, %p123
      %p125 = scmp.ne.s32.totalorder %s114, %s115
      %p126 = scmp.eq.s32.totalorder %s26, 0
      %p127 = por %p125, %p126
      %p128 = scmp.ne.s32.totalorder %s114, %s115
      %p129 = scmp.eq.s32.totalorder %s27, 3
      %p130 = por %p128, %p129
      %p132 = scmp.ne.s32.totalorder %s115, %s131
      %p133 = scmp.eq.s32.totalorder %s27, 0
      %p134 = por %p132, %p133
      %s135 = ssub.s32 %s29, %s36
      %p136 = scmp.eq.s32.totalorder %s135, 0
      %s138 = sadd.s32 %s137, 1
      %s139 = scalar_select %p136, %s137, %s138
      %p142 = pneg %p136
      %p143 = scmp.eq.s32.totalorder %s21, 3
      %p144 = por %p142, %p143
      %p145 = scmp.ne.s32.totalorder %s137, %s140
      %p146 = scmp.eq.s32.totalorder %s21, 0
      %p147 = por %p145, %p146
      %p148 = scmp.ne.s32.totalorder %s137, %s140
      %p149 = scmp.eq.s32.totalorder %s26, 3
      %p150 = por %p148, %p149
      %p151 = scmp.ne.s32.totalorder %s140, %s141
      %p152 = scmp.eq.s32.totalorder %s26, 0
      %p153 = por %p151, %p152
      %p154 = scmp.ne.s32.totalorder %s140, %s141
      %p155 = scmp.eq.s32.totalorder %s27, 3
      %p156 = por %p154, %p155
      %p158 = scmp.ne.s32.totalorder %s141, %s157
      %p159 = scmp.eq.s32.totalorder %s27, 0
      %p160 = por %p158, %p159
      %s161 = ssub.s32 %s28, %s40
      %s162 = ssub.s32 %s29, %s36
      %s163 = sor.u32 %s161, %s162
      %p164 = scmp.eq.s32.totalorder %s163, 0
      %s166 = sadd.s32 %s165, 1
      %s167 = scalar_select %p164, %s165, %s166
      %p170 = pneg %p164
      %p171 = scmp.eq.s32.totalorder %s21, 3
      %p172 = por %p170, %p171
      %p173 = scmp.ne.s32.totalorder %s165, %s168
      %p174 = scmp.eq.s32.totalorder %s21, 0
      %p175 = por %p173, %p174
      %p176 = scmp.ne.s32.totalorder %s165, %s168
      %p177 = scmp.eq.s32.totalorder %s26, 3
      %p178 = por %p176, %p177
      %p179 = scmp.ne.s32.totalorder %s168, %s169
      %p180 = scmp.eq.s32.totalorder %s26, 0
      %p181 = por %p179, %p180
      %p182 = scmp.ne.s32.totalorder %s168, %s169
      %p183 = scmp.eq.s32.totalorder %s27, 3
      %p184 = por %p182, %p183
      %p186 = scmp.ne.s32.totalorder %s169, %s185
      %p187 = scmp.eq.s32.totalorder %s27, 0
      %p188 = por %p186, %p187
      %p189 = scmp.le.s32.totalorder 1, %s21
      %p190 = scmp.lt.s32.totalorder %s21, 5
      %p191 = pnand %p189, %p190
      %p192 = pneg %p191
      // Predicated region
      $region9: #{tpu_custom_call.1} parent=5 // pred_check
        _
      $region10: #{tpu_custom_call.1} parent=5 // pred_check_branch
        %194 = sbr.rel (%p191) target = $region12
      $region11: #{tpu_custom_call.1} parent=5 // pred_region
        %s195 = ssub.s32 %s21, 1
        // Predicated region
        $region13: #{tpu_custom_call.1} parent=11 // pred_check
          %p196 = pneg %p80
        $region14: #{tpu_custom_call.1} parent=11 // pred_check_branch
          %198 = sbr.rel (%p196) target = $region16
        $region15: #{tpu_custom_call.1} parent=11 // pred_region
          %s200 = ssub.s32 32, 32
          %201 = vsyncadd [#allocation7], %s200
          %s203 = sshll.u32 [#allocation6], 4
          %s204 = int_to_ptr.vmem [resolvable:$true] %s203
          %206 = dma.hbm_to_vmem [thread:$0]  %s1, 32, %s204, [#allocation7]
        $region16: #{tpu_custom_call.1} parent=11 // pred_fallthru
          _
        // Predicated region
        $region17: #{tpu_custom_call.1} parent=11 // pred_check
          %p207 = pneg %p101
        $region18: #{tpu_custom_call.1} parent=11 // pred_check_branch
          %209 = sbr.rel (%p207) target = $region20
        $region19: #{tpu_custom_call.1} parent=11 // pred_region
          %s211 = ssub.s32 32, 32
          %212 = vsyncadd [#allocation7], %s211
          %s214 = sshll.u32 [#allocation8], 4
          %s215 = int_to_ptr.vmem [resolvable:$true] %s214
          %217 = dma.hbm_to_vmem [thread:$0]  %s2, 32, %s215, [#allocation7]
        $region20: #{tpu_custom_call.1} parent=11 // pred_fallthru
          _
      $region12: #{tpu_custom_call.1} parent=5 // pred_fallthru
        _
      %p218 = scmp.lt.s32.totalorder %s21, 4
      // Predicated region
      $region21: #{tpu_custom_call.1} parent=5 // pred_check
        %p219 = pneg %p218
      $region22: #{tpu_custom_call.1} parent=5 // pred_check_branch
        %221 = sbr.rel (%p219) target = $region24
      $region23: #{tpu_custom_call.1} parent=5 // pred_region
        // Predicated region
        $region25: #{tpu_custom_call.1} parent=23 // pred_check
          %p222 = pneg %p53
        $region26: #{tpu_custom_call.1} parent=23 // pred_check_branch
          %224 = sbr.rel (%p222) target = $region28
        $region27: #{tpu_custom_call.1} parent=23 // pred_region
          %s225 = sand.u32 %s43, 1
          %s226 = scalar_lea.sflag [#allocation4], %s225
          %s227 = sand.u32 %s43, 1
          %s228 = smul.addr %s227, 16
          %s229 = scalar_lea.vmem [#allocation3], %s228
          %s231 = ssub.s32 256, 256
          %232 = vsyncadd %s226, %s231
          %s233 = smul.addr %s28, 2
          %s234 = smul.addr %s233, 128
          %s235 = scalar_lea.hbm %s0, %s234
          %s237 = sshll.u32 %s229, 4
          %s238 = int_to_ptr.vmem [resolvable:$true] %s237
          %240 = dma.hbm_to_vmem [thread:$0]  %s235, 256, %s238, %s226
        $region28: #{tpu_custom_call.1} parent=23 // pred_fallthru
          _
        // Predicated region
        $region29: #{tpu_custom_call.1} parent=23 // pred_check
          %p241 = pneg %p121
        $region30: #{tpu_custom_call.1} parent=23 // pred_check_branch
          %243 = sbr.rel (%p241) target = $region32
        $region31: #{tpu_custom_call.1} parent=23 // pred_region
          %s244 = sand.u32 %s21, 1
          %s245 = scalar_lea.sflag [#allocation10], %s244
          %s246 = sand.u32 %s111, 1
          %s247 = smul.addr %s246, 128
          %s248 = scalar_lea.vmem [#allocation9], %s247
          %s250 = ssub.s32 2048, 2048
          %251 = vsyncadd %s245, %s250
          %s252 = smul.addr %s29, 64
          %s253 = scalar_lea.hbm %s3, %s252
          %s254 = sshll.u32 %s248, 4
          %s255 = int_to_ptr.vmem [resolvable:$true] %s254
          %260 = dma.hbm_to_vmem [thread:$0]  %s253, 2048, %s255, %s245, 128, 64, 4
        $region32: #{tpu_custom_call.1} parent=23 // pred_fallthru
          _
        // Predicated region
        $region33: #{tpu_custom_call.1} parent=23 // pred_check
          %p261 = pneg %p147
        $region34: #{tpu_custom_call.1} parent=23 // pred_check_branch
          %263 = sbr.rel (%p261) target = $region36
        $region35: #{tpu_custom_call.1} parent=23 // pred_region
          %s264 = sand.u32 %s21, 1
          %s265 = scalar_lea.sflag [#allocation10], %s264
          %s266 = sand.u32 %s137, 1
          %s267 = scalar_lea.vmem [#allocation11], %s266
          %s269 = ssub.s32 16, 16
          %270 = vsyncadd %s265, %s269
          %s271 = smul.addr %s29, 16
          %s272 = scalar_lea.hbm %s4, %s271
          %s274 = sshll.u32 %s267, 4
          %s275 = int_to_ptr.vmem [resolvable:$true] %s274
          %277 = dma.hbm_to_vmem [thread:$0]  %s272, 16, %s275, %s265
        $region36: #{tpu_custom_call.1} parent=23 // pred_fallthru
          _
      $region24: #{tpu_custom_call.1} parent=5 // pred_fallthru
        _
      %p278 = scmp.le.s32.totalorder 1, %s21
      %p279 = scmp.lt.s32.totalorder %s21, 5
      %p280 = pnand %p278, %p279
      %p281 = pneg %p280
      // Predicated region
      $region37: #{tpu_custom_call.1} parent=5 // pred_check
        _
      $region38: #{tpu_custom_call.1} parent=5 // pred_check_branch
        %283 = sbr.rel (%p280) target = $region40
      $region39: #{tpu_custom_call.1} parent=5 // pred_region
        %s284 = ssub.s32 %s21, 1
        %s285 = sand.u32 %s46, 1
        %s286 = scalar_lea.sflag [#allocation4], %s285
        %s287 = sand.u32 %s46, 1
        %s288 = smul.addr %s287, 16
        %s289 = scalar_lea.vmem [#allocation3], %s288
        // Predicated region
        $region41: #{tpu_custom_call.1} parent=39 // pred_check
          %p290 = pneg %p59
        $region42: #{tpu_custom_call.1} parent=39 // pred_check_branch
          %292 = sbr.rel (%p290) target = $region44
        $region43: #{tpu_custom_call.1} parent=39 // pred_region
          %293 = dma.done %s286, 256
        $region44: #{tpu_custom_call.1} parent=39 // pred_fallthru
          _
        // Predicated region
        $region45: #{tpu_custom_call.1} parent=39 // pred_check
          %p294 = pneg %p80
        $region46: #{tpu_custom_call.1} parent=39 // pred_check_branch
          %296 = sbr.rel (%p294) target = $region48
        $region47: #{tpu_custom_call.1} parent=39 // pred_region
          %297 = dma.done [#allocation7], 32
        $region48: #{tpu_custom_call.1} parent=39 // pred_fallthru
          _
        // Predicated region
        $region49: #{tpu_custom_call.1} parent=39 // pred_check
          %p298 = pneg %p101
        $region50: #{tpu_custom_call.1} parent=39 // pred_check_branch
          %300 = sbr.rel (%p298) target = $region52
        $region51: #{tpu_custom_call.1} parent=39 // pred_region
          %301 = dma.done [#allocation7], 32
        $region52: #{tpu_custom_call.1} parent=39 // pred_fallthru
          _
        %s302 = sand.u32 %s26, 1
        %s303 = scalar_lea.sflag [#allocation10], %s302
        %s304 = sand.u32 %s114, 1
        %s305 = smul.addr %s304, 128
        %s306 = scalar_lea.vmem [#allocation9], %s305
        // Predicated region
        $region53: #{tpu_custom_call.1} parent=39 // pred_check
          %p307 = pneg %p127
        $region54: #{tpu_custom_call.1} parent=39 // pred_check_branch
          %309 = sbr.rel (%p307) target = $region56
        $region55: #{tpu_custom_call.1} parent=39 // pred_region
          %310 = dma.done %s303, 2048
        $region56: #{tpu_custom_call.1} parent=39 // pred_fallthru
          _
        %s311 = sand.u32 %s26, 1
        %s312 = scalar_lea.sflag [#allocation10], %s311
        %s313 = sand.u32 %s140, 1
        %s314 = scalar_lea.vmem [#allocation11], %s313
        // Predicated region
        $region57: #{tpu_custom_call.1} parent=39 // pred_check
          %p315 = pneg %p153
        $region58: #{tpu_custom_call.1} parent=39 // pred_check_branch
          %317 = sbr.rel (%p315) target = $region60
        $region59: #{tpu_custom_call.1} parent=39 // pred_region
          %318 = dma.done %s312, 16
        $region60: #{tpu_custom_call.1} parent=39 // pred_fallthru
          _
        %s319 = sand.u32 %s46, 1
        %s320 = scalar_lea.sflag [#allocation4], %s319
        %s321 = sand.u32 %s46, 1
        %s322 = smul.addr %s321, 16
        %s323 = scalar_lea.vmem [#allocation3], %s322
        %p324 = pneg %p59
        %p325 = pneg %p56
        %p326 = pneg %p80
        %p327 = pneg %p77
        %p328 = pneg %p101
        %p329 = pneg %p98
        %s330 = sand.u32 %s26, 1
        %s331 = scalar_lea.sflag [#allocation10], %s330
        %s332 = sand.u32 %s114, 1
        %s333 = smul.addr %s332, 128
        %s334 = scalar_lea.vmem [#allocation9], %s333
        %p335 = pneg %p127
        %p336 = pneg %p124
        %s337 = sand.u32 %s26, 1
        %s338 = scalar_lea.sflag [#allocation10], %s337
        %s339 = sand.u32 %s140, 1
        %s340 = scalar_lea.vmem [#allocation11], %s339
        %p341 = pneg %p153
        %p342 = pneg %p150
        %p343 = pneg %p181
        %p344 = pneg %p178
        %s345 = sand.u32 %s168, 1
        %s346 = scalar_lea.sflag [#allocation5], %s345
        %s347 = sand.u32 %s168, 1
        %s348 = smul.addr %s347, 8
        %s349 = scalar_lea.vmem [#allocation12], %s348
        %p351 = scmp.eq.s32.totalorder %s31, 0
        // Predicated region
        $region61: #{tpu_custom_call.1} parent=39 // pred_check
          %p352 = pneg %p351
        $region62: #{tpu_custom_call.1} parent=39 // pred_check_branch
          %354 = sbr.rel (%p352) target = $region64
        $region63: #{tpu_custom_call.1} parent=39 // pred_region
          %v355 = vld [vmem:[%s289] sm:$0xff]
          %v356 = vld [vmem:[%s289 + $0x8] sm:$0xff]
          %v357 = vadd.f32 %v355, %v356
          %358 = vadd.xlane.f32.xlu0 %v357
          %v359 = vpop.xlane.xlu0 %358
          %v360 = vmul.f32 %v355, %v355
          %v361 = vmul.f32 %v356, %v356
          %v362 = vadd.f32 %v360, %v361
          %363 = vadd.xlane.f32.xlu0 %v362
          %v364 = vpop.xlane.xlu0 %363
          %v365 = vmul.f32 %v359, 0.00390625
          %v366 = vmul.f32 %v364, 0.00390625
          %v367 = vmul.f32 %v365, %v365
          %v368 = vsub.f32 %v366, %v367
          %v369 = vmax.f32 %v368, 0.0
          %v370 = vadd.f32 %v369, 1e-05
          %v371 = vrsqrt.pop %v370
          %v372 = vld [vmem:[#allocation6] sm:$0x3]
          %v373 = vld [vmem:[#allocation8] sm:$0x3]
          %v374 = vsub.f32 %v355, %v365
          %v375 = vsub.f32 %v356, %v365
          %v376 = vmul.f32 %v374, %v371
          %v377 = vmul.f32 %v375, %v371
          %v379 = vlaneseq
          %v380 = vshrl.u32 %v379, 7
          %v381 = vsub.s32 0, %v380
          %v382 = vrot.slane %v372, %v381
          %v383 = vlaneseq
          %v384 = vshrl.u32 %v383, 7
          %v385 = vsub.s32 1, %v384
          %v386 = vrot.slane %v372, %v385
          %v389 = vmul.f32 %v376, %v382
          %v390 = vmul.f32 %v377, %v386
          %v392 = vlaneseq
          %v393 = vshrl.u32 %v392, 7
          %v394 = vsub.s32 0, %v393
          %v395 = vrot.slane %v373, %v394
          %v396 = vlaneseq
          %v397 = vshrl.u32 %v396, 7
          %v398 = vsub.s32 1, %v397
          %v399 = vrot.slane %v373, %v398
          %v402 = vadd.f32 %v389, %v395
          %v403 = vadd.f32 %v390, %v399
          %v404 = vpack.c.bf16 %v402, %v402
          %v405 = vpack.c.bf16 %v403, %v403
          %v408 = vunpack.c.l.b16 %v404
          %v409 = vunpack.c.l.b16 %v405
          %v410 = vpack.c.b16 %v409, %v408
          %412 = vst [vmem:[#allocation2] sm:$0xff] %v410
        $region64: #{tpu_custom_call.1} parent=39 // pred_fallthru
          _
        %v413 = vld [vmem:[#allocation2] sm:$0xff]
        %v414 = vld [vmem:[%s306] sm:$0xf]
        %v415 = vld [vmem:[%s306 + $0x4] sm:$0xf]
        %v416 = vld [vmem:[%s306 + $0x8] sm:$0xf]
        %v417 = vld [vmem:[%s306 + $0xc] sm:$0xf]
        %v418 = vld [vmem:[%s306 + $0x10] sm:$0xf]
        %v419 = vld [vmem:[%s306 + $0x14] sm:$0xf]
        %v420 = vld [vmem:[%s306 + $0x18] sm:$0xf]
        %v421 = vld [vmem:[%s306 + $0x1c] sm:$0xf]
        %v422 = vld [vmem:[%s306 + $0x20] sm:$0xf]
        %v423 = vld [vmem:[%s306 + $0x24] sm:$0xf]
        %v424 = vld [vmem:[%s306 + $0x28] sm:$0xf]
        %v425 = vld [vmem:[%s306 + $0x2c] sm:$0xf]
        %v426 = vld [vmem:[%s306 + $0x30] sm:$0xf]
        %v427 = vld [vmem:[%s306 + $0x34] sm:$0xf]
        %v428 = vld [vmem:[%s306 + $0x38] sm:$0xf]
        %v429 = vld [vmem:[%s306 + $0x3c] sm:$0xf]
        %v430 = vld [vmem:[%s306 + $0x40] sm:$0xf]
        %v431 = vld [vmem:[%s306 + $0x44] sm:$0xf]
        %v432 = vld [vmem:[%s306 + $0x48] sm:$0xf]
        %v433 = vld [vmem:[%s306 + $0x4c] sm:$0xf]
        %v434 = vld [vmem:[%s306 + $0x50] sm:$0xf]
        %v435 = vld [vmem:[%s306 + $0x54] sm:$0xf]
        %v436 = vld [vmem:[%s306 + $0x58] sm:$0xf]
        %v437 = vld [vmem:[%s306 + $0x5c] sm:$0xf]
        %v438 = vld [vmem:[%s306 + $0x60] sm:$0xf]
        %v439 = vld [vmem:[%s306 + $0x64] sm:$0xf]
        %v440 = vld [vmem:[%s306 + $0x68] sm:$0xf]
        %v441 = vld [vmem:[%s306 + $0x6c] sm:$0xf]
        %v442 = vld [vmem:[%s306 + $0x70] sm:$0xf]
        %v443 = vld [vmem:[%s306 + $0x74] sm:$0xf]
        %v444 = vld [vmem:[%s306 + $0x78] sm:$0xf]
        %v445 = vld [vmem:[%s306 + $0x7c] sm:$0xf]
        %v446 = vld [vmem:[%s314] sm:$0x1]
        %v448 = vlaneseq
        %v449 = vshrl.u32 %v448, 7
        %v450 = vsub.s32 0, %v449
        %v451 = vrot.slane %v446, %v450
        %v454 = vunpack.c.l.b16 %v413
        %v455 = vunpack.c.h.b16 %v413
        %v456 = vpack.c.b16 %v454, %v454
        %v457 = vpack.c.b16 %v455, %v455
        %v492 = vunpack.c.l.b16 %v414
        %v493 = vunpack.c.l.b16 %v415
        %v494 = vunpack.c.l.b16 %v416
        %v495 = vunpack.c.l.b16 %v417
        %v496 = vunpack.c.l.b16 %v418
        %v497 = vunpack.c.l.b16 %v419
        %v498 = vunpack.c.l.b16 %v420
        %v499 = vunpack.c.l.b16 %v421
        %v500 = vunpack.c.l.b16 %v422
        %v501 = vunpack.c.l.b16 %v423
        %v502 = vunpack.c.l.b16 %v424
        %v503 = vunpack.c.l.b16 %v425
        %v504 = vunpack.c.l.b16 %v426
        %v505 = vunpack.c.l.b16 %v427
        %v506 = vunpack.c.l.b16 %v428
        %v507 = vunpack.c.l.b16 %v429
        %v508 = vunpack.c.l.b16 %v430
        %v509 = vunpack.c.l.b16 %v431
        %v510 = vunpack.c.l.b16 %v432
        %v511 = vunpack.c.l.b16 %v433
        %v512 = vunpack.c.l.b16 %v434
        %v513 = vunpack.c.l.b16 %v435
        %v514 = vunpack.c.l.b16 %v436
        %v515 = vunpack.c.l.b16 %v437
        %v516 = vunpack.c.l.b16 %v438
        %v517 = vunpack.c.l.b16 %v439
        %v518 = vunpack.c.l.b16 %v440
        %v519 = vunpack.c.l.b16 %v441
        %v520 = vunpack.c.l.b16 %v442
        %v521 = vunpack.c.l.b16 %v443
        %v522 = vunpack.c.l.b16 %v444
        %v523 = vunpack.c.l.b16 %v445
        %v524 = vpack.c.b16 %v493, %v492
        %v525 = vpack.c.b16 %v495, %v494
        %v526 = vpack.c.b16 %v497, %v496
        %v527 = vpack.c.b16 %v499, %v498
        %v528 = vpack.c.b16 %v501, %v500
        %v529 = vpack.c.b16 %v503, %v502
        %v530 = vpack.c.b16 %v505, %v504
        %v531 = vpack.c.b16 %v507, %v506
        %v532 = vpack.c.b16 %v509, %v508
        %v533 = vpack.c.b16 %v511, %v510
        %v534 = vpack.c.b16 %v513, %v512
        %v535 = vpack.c.b16 %v515, %v514
        %v536 = vpack.c.b16 %v517, %v516
        %v537 = vpack.c.b16 %v519, %v518
        %v538 = vpack.c.b16 %v521, %v520
        %v539 = vpack.c.b16 %v523, %v522
        %556 = vmatprep.subr.bf16.mxu0 0
        %557 = vmatpush1.bf16.msra.mxu0 %v524
        %558 = vmatprep.subr.bf16.mxu0 0
        %559 = vmatpush1.bf16.msra.mxu0 %v525
        %560 = vmatprep.subr.bf16.mxu0 0
        %561 = vmatpush1.bf16.msra.mxu0 %v526
        %562 = vmatprep.subr.bf16.mxu0 0
        %563 = vmatpush1.bf16.msra.mxu0 %v527
        %564 = vmatprep.subr.bf16.mxu0 0
        %565 = vmatpush1.bf16.msra.mxu0 %v528
        %566 = vmatprep.subr.bf16.mxu0 0
        %567 = vmatpush1.bf16.msra.mxu0 %v529
        %568 = vmatprep.subr.bf16.mxu0 0
        %569 = vmatpush1.bf16.msra.mxu0 %v530
        %570 = vmatprep.subr.bf16.mxu0 0
        %571 = vmatpush1.bf16.msra.mxu0 %v531
        %572 = vmatprep.subr.bf16.mxu0 0
        %573 = vmatpush1.bf16.msra.mxu0 %v532
        %574 = vmatprep.subr.bf16.mxu0 0
        %575 = vmatpush1.bf16.msra.mxu0 %v533
        %576 = vmatprep.subr.bf16.mxu0 0
        %577 = vmatpush1.bf16.msra.mxu0 %v534
        %578 = vmatprep.subr.bf16.mxu0 0
        %579 = vmatpush1.bf16.msra.mxu0 %v535
        %580 = vmatprep.subr.bf16.mxu0 0
        %581 = vmatpush1.bf16.msra.mxu0 %v536
        %582 = vmatprep.subr.bf16.mxu0 0
        %583 = vmatpush1.bf16.msra.mxu0 %v537
        %584 = vmatprep.subr.bf16.mxu0 0
        %585 = vmatpush1.bf16.msra.mxu0 %v538
        %586 = vmatprep.subr.bf16.mxu0 0
        %587 = vmatpush1.bf16.msra.mxu0 %v539
        %588 = vmatprep.mubr.bf16.mxu0 %v457
        %589 = vmatmul.mubr.bf16.gmra.mrb[0].mxu0 %v456
        %v590 = vpop.f32.mrb[0].mxu0
        %v591 = vadd.f32 %v451, %v590
        %v592 = vpop.f32.mrb[0].mxu0
        %v593 = vpop.f32.mrb[0].mxu0
        %v594 = vpop.f32.mrb[0].mxu0
        %595 = vdwg.mxu0
        %596 = vst [vmem:[%s349] sm:$0xff] %v591
        %s597 = sand.u32 %s168, 1
        %s598 = scalar_lea.sflag [#allocation5], %s597
        %s599 = sand.u32 %s168, 1
        %s600 = smul.addr %s599, 8
        %s601 = scalar_lea.vmem [#allocation12], %s600
        // Predicated region
        $region65: #{tpu_custom_call.1} parent=39 // pred_check
          %p602 = pneg %p178
        $region66: #{tpu_custom_call.1} parent=39 // pred_check_branch
          %604 = sbr.rel (%p602) target = $region68
        $region67: #{tpu_custom_call.1} parent=39 // pred_region
          %s606 = ssub.s32 128, 128
          %607 = vsyncadd %s598, %s606
          %s608 = smul.addr %s30, 2
          %s609 = sadd.s32 %s31, %s608
          %s610 = smul.addr %s609, 128
          %s611 = scalar_lea.hbm %s5, %s610
          %s613 = sshll.u32 %s601, 4
          %s614 = int_to_ptr.vmem [resolvable:$true] %s613
          %616 = dma.vmem_to_hbm [thread:$0]  %s614, 128, %s611, %s598
        $region68: #{tpu_custom_call.1} parent=39 // pred_fallthru
          _
      $region40: #{tpu_custom_call.1} parent=5 // pred_fallthru
        _
      %p617 = scmp.le.s32.totalorder 2, %s21
      // Predicated region
      $region69: #{tpu_custom_call.1} parent=5 // pred_check
        %p618 = pneg %p617
      $region70: #{tpu_custom_call.1} parent=5 // pred_check_branch
        %620 = sbr.rel (%p618) target = $region72
      $region71: #{tpu_custom_call.1} parent=5 // pred_region
        %s621 = ssub.s32 %s21, 2
        // Predicated region
        $region73: #{tpu_custom_call.1} parent=71 // pred_check
          %p622 = pneg %p184
        $region74: #{tpu_custom_call.1} parent=71 // pred_check_branch
          %624 = sbr.rel (%p622) target = $region76
        $region75: #{tpu_custom_call.1} parent=71 // pred_region
          %s625 = sand.u32 %s169, 1
          %s626 = scalar_lea.sflag [#allocation5], %s625
          %s627 = sand.u32 %s169, 1
          %s628 = smul.addr %s627, 8
          %s629 = scalar_lea.vmem [#allocation12], %s628
          %630 = dma.done %s626, 128
        $region76: #{tpu_custom_call.1} parent=71 // pred_fallthru
          _
      $region72: #{tpu_custom_call.1} parent=5 // pred_fallthru
        _
    $region6: #{tpu_custom_call.1} parent=1 // loop_footer
      %s25 = sadd.s32 1, %s21
    $region7: #{tpu_custom_call.1} parent=1 // loop_footer_branch
      %20 = sbr.rel target = $region3
    $region8: #{tpu_custom_call.1} parent=1 // loop_exit
      _
    %631 = vsyncpa [#allocation4], 1
    %s632 = scalar_lea.sflag [#allocation4], 1
    %633 = vsyncpa %s632, 1
    %634 = vsyncpa [#allocation7], 1
    %635 = vsyncpa [#allocation10], 1
    %s636 = scalar_lea.sflag [#allocation10], 1
    %637 = vsyncpa %s636, 1
    %638 = vsyncpa [#allocation5], 1
    %s639 = scalar_lea.sflag [#allocation5], 1
    %640 = vsyncpa %s639, 1

</llo_original>
